<compile_context>
chip_gen: v6e
topology: v6e:2x2x1
jax: 0.10.0
libtpu: 0.0.40
codegen_flags: <defaults>
</compile_context>

<pallas_src>
import functools
import math

import jax
import jax.numpy as jnp
from jax.experimental import pallas as pl
from jax.experimental.pallas import tpu as pltpu


_LANE = 512             # lane-dense last dim: large multiple of 128
_MAX_BLOCK_ROWS = 1024  # 1024 x 512 x f32 = 2 MiB per buffer (v5e-safe with double buffering)


def _refiner_kernel(flow_ref, refinement_ref, out_ref):
    # Pure elementwise add on the VPU; one lane-dense tile per grid step.
    out_ref[...] = flow_ref[...] + refinement_ref[...]


@jax.jit
def refiner_forward(flow: jax.Array, refinement: jax.Array) -> jax.Array:
    """refined_flow = flow + refinement, computed in a Pallas TPU kernel.

    flow:        (B, N, 3) float32 (any shape/dtype actually works)
    refinement:  same shape/dtype as flow (the Refiner parameter)
    """
    assert flow.shape == refinement.shape, "refinement must match flow shape"
    assert flow.dtype == refinement.dtype, "refinement must match flow dtype"

    orig_shape = flow.shape
    total = math.prod(orig_shape)

    # ---- lane-dense 2-D view: (rows, _LANE), xyz folded into the flat dim ----
    lane = _LANE
    rows = pl.cdiv(total, lane)

    if rows <= _MAX_BLOCK_ROWS:
        # Small case: one grid step, whole (reshaped) array as a single block.
        block_rows = rows
        grid_rows = 1
    else:
        # Large case: ~2 MiB blocks along the leading dim, padded to a multiple.
        block_rows = _MAX_BLOCK_ROWS
        rows = pl.cdiv(rows, block_rows) * block_rows
        grid_rows = rows // block_rows

    padded_total = rows * lane
    pad = padded_total - total

    flat_flow = flow.reshape(-1)
    flat_ref = refinement.reshape(-1)
    if pad:
        flat_flow = jnp.pad(flat_flow, (0, pad))
        flat_ref = jnp.pad(flat_ref, (0, pad))

    flow2d = flat_flow.reshape(rows, lane)
    ref2d = flat_ref.reshape(rows, lane)

    spec = pl.BlockSpec((block_rows, lane), lambda i: (i, 0))

    out2d = pl.pallas_call(
        _refiner_kernel,
        out_shape=jax.ShapeDtypeStruct((rows, lane), flow.dtype),
        grid=(grid_rows,),
        in_specs=[spec, spec],
        out_specs=spec,
        compiler_params=pltpu.CompilerParams(
            dimension_semantics=("parallel",),
        ),
    )(flow2d, ref2d)

    out_flat = out2d.reshape(-1)
    if pad:
        out_flat = out_flat[:total]
    return out_flat.reshape(orig_shape)


class RefinerPallas:
    """Minimal JAX counterpart of the PyTorch Refiner module (forward only)."""

    def __init__(self, shape):
        # torch.nn.Parameter(torch.zeros(shape, dtype=torch.float32))
        self.refinement = jnp.zeros(shape, dtype=jnp.float32)

    def __call__(self, flow):
        return refiner_forward(flow, self.refinement)

    # TODO(synk): refine_flow (test-time optimization loop with chamfer /
    # smooth losses and an optimizer) is training-loop machinery, not a single
    # forward pass, and is intentionally not ported to a Pallas kernel.


if __name__ == "__main__":
    key = jax.random.PRNGKey(0)
    k_flow, k_ref, k_flow2, k_ref2 = jax.random.split(key, 4)

    # Production-like small shape: flow is (1, n_points, 3).
    B, N, C = 1, 512, 3
    flow = jax.random.normal(k_flow, (B, N, C), dtype=jnp.float32)

    # Module initializes refinement to zeros; the forward must be identity then.
    model = RefinerPallas((B, N, C))
    out_zero = jax.block_until_ready(model(flow))
    assert jnp.allclose(out_zero, flow), "zero refinement must be identity"

    # Non-zero refinement: check the add path against a JAX reference.
    refinement_nz = 0.01 * jax.random.normal(k_ref, (B, N, C), dtype=jnp.float32)
    out_nz = jax.block_until_ready(refiner_forward(flow, refinement_nz))
    ref = flow + refinement_nz
    assert jnp.allclose(out_nz, ref, atol=1e-6), "kernel mismatch vs reference add"

    # Arbitrary N (not a multiple of anything nice) to exercise tail padding.
    B2, N2, C2 = 1, 500, 3
    flow2 = jax.random.normal(k_flow2, (B2, N2, C2), dtype=jnp.float32)
    ref2_param = 0.05 * jax.random.normal(k_ref2, (B2, N2, C2), dtype=jnp.float32)
    out2 = jax.block_until_ready(refiner_forward(flow2, ref2_param))
    assert jnp.allclose(out2, flow2 + ref2_param, atol=1e-6), "padded-tail path mismatch"

    print("KERNEL_OK")
</pallas_src>

<mosaic_0001>
module attributes {stable_mosaic.version = 11 : i64} {
  func.func @_refiner_kernel(%arg0: i32, %arg1: memref<3x512xf32, #tpu.memory_space<vmem>>, %arg2: memref<3x512xf32, #tpu.memory_space<vmem>>, %arg3: memref<3x512xf32, #tpu.memory_space<vmem>>) attributes {dimension_semantics = [#tpu.dimension_semantics<parallel>], iteration_bounds = array<i64: 1>, scalar_prefetch = 0 : i64, scratch_operands = 0 : i64, tpu.core_type = #tpu.core_type<tc>, window_params = [{transform_indices = @transform_0, window_bounds = array<i64: 3, 512>}, {transform_indices = @transform_1, window_bounds = array<i64: 3, 512>}, {transform_indices = @transform_2, window_bounds = array<i64: 3, 512>}]} {
    %c0 = arith.constant 0 : index
    %c0_0 = arith.constant 0 : index
    %0 = vector.load %arg1[%c0, %c0_0] : memref<3x512xf32, #tpu.memory_space<vmem>>, vector<3x512xf32>
    %c0_1 = arith.constant 0 : index
    %c0_2 = arith.constant 0 : index
    %1 = vector.load %arg2[%c0_1, %c0_2] : memref<3x512xf32, #tpu.memory_space<vmem>>, vector<3x512xf32>
    %2 = arith.addf %0, %1 : vector<3x512xf32>
    %c0_3 = arith.constant 0 : index
    %c0_4 = arith.constant 0 : index
    %3 = vector.load %arg3[%c0_3, %c0_4] : memref<3x512xf32, #tpu.memory_space<vmem>>, vector<3x512xf32>
    tpu.vector_store %arg3[%c0_3, %c0_4], %2 {strides = array<i32>} : memref<3x512xf32, #tpu.memory_space<vmem>>, vector<3x512xf32>,
    return
  }
  func.func @transform_0(%arg0: i32) -> (i32, i32) {
    %c0_i32 = arith.constant 0 : i32
    %c0_i32_0 = arith.constant 0 : i32
    return %arg0, %c0_i32 : i32, i32
  }
  func.func @transform_1(%arg0: i32) -> (i32, i32) {
    %c0_i32 = arith.constant 0 : i32
    %c0_i32_0 = arith.constant 0 : i32
    return %arg0, %c0_i32 : i32, i32
  }
  func.func @transform_2(%arg0: i32) -> (i32, i32) {
    %c0_i32 = arith.constant 0 : i32
    %c0_i32_0 = arith.constant 0 : i32
    return %arg0, %c0_i32 : i32, i32
  }
}

</mosaic_0001>

<llo_original>
// kernel: refiner_forward.1
$region0: #{refiner_forward.1}
  #allocation0 [shape = 'u32[]', space=smem, size = 0x4, offset = 0x4, fixed_abs, tag = 'smem constant byte address 0x4 - core index']
  #allocation1 [shape = 'u32[144,128]{1,0:T(1,128)}', space=vmem, size = 0x12000, scoped, tag = 'internal scratch']
  %s0 = inlined_call_operand.vmem [shape: f32[3,512], index: 0, kind: input, shape index: {}]
  %s1 = inlined_call_operand.vmem [shape: f32[3,512], index: 1, kind: input, shape index: {}]
  %s2 = inlined_call_operand.vmem [shape: f32[3,512], index: 2, kind: output, shape index: {}]
  %s3 = sld [smem:[#allocation0]]
  $region18: #{refiner_forward.1} parent=0
    _
  %s5 = ssub.s32 1, %s3
  %s6 = scalar_select 0, %s5, %s3
  // Predicated region
  $region2: #{refiner_forward.1} parent=0 // pred_check
    _
  $region3: #{refiner_forward.1} parent=0 // pred_check_branch
    %8 = sbr.rel (0) target = $region5
  $region4: #{refiner_forward.1} parent=0 // pred_region
    _
  $region5: #{refiner_forward.1} parent=0 // pred_fallthru
    _
  // Predicated region
  $region6: #{refiner_forward.1} parent=0 // pred_check
    _
  $region7: #{refiner_forward.1} parent=0 // pred_check_branch
    %10 = sbr.rel (0) target = $region9
  $region8: #{refiner_forward.1} parent=0 // pred_region
    _
  $region9: #{refiner_forward.1} parent=0 // pred_fallthru
    _
  %v11 = vld [vmem:[%s0] sm:$0x77]
  %v12 = vld [vmem:[%s0 + $0x8] sm:$0x77]
  %v13 = vld [vmem:[%s1] sm:$0x77]
  %v14 = vld [vmem:[%s1 + $0x8] sm:$0x77]
  %v15 = vadd.f32 %v11, %v13
  %v16 = vadd.f32 %v12, %v14
  %17 = vst [vmem:[%s2] sm:$0x77] %v15
  %18 = vst [vmem:[%s2 + $0x8] sm:$0x77] %v16
  // Predicated region
  $region10: #{refiner_forward.1} parent=0 // pred_check
    _
  $region11: #{refiner_forward.1} parent=0 // pred_check_branch
    %20 = sbr.rel (0) target = $region13
  $region12: #{refiner_forward.1} parent=0 // pred_region
    _
  $region13: #{refiner_forward.1} parent=0 // pred_fallthru
    _
  // Predicated region
  $region14: #{refiner_forward.1} parent=0 // pred_check
    _
  $region15: #{refiner_forward.1} parent=0 // pred_check_branch
    %22 = sbr.rel (0) target = $region17
  $region16: #{refiner_forward.1} parent=0 // pred_region
    _
  $region17: #{refiner_forward.1} parent=0 // pred_fallthru
    _

</llo_original>
